<compile_context>
chip_gen: v7x
topology: tpu7x:2x2x1
jax: 0.10.0
libtpu: 0.0.40
codegen_flags: <defaults>
</compile_context>

<pallas_src>
import numpy as np
import jax
import jax.numpy as jnp
from jax.experimental import pallas as pl
from jax.experimental.pallas import tpu as pltpu


# --------------------------------------------------------------------------
# One-time packing + fused kernel + jitted forward.
# --------------------------------------------------------------------------
def build_gating_poe(params, embed_dim, num_full, num_comb, num_spec):
    D = embed_dim
    N = num_full + num_comb + num_spec
    ND = N * D
    C1 = N + ND + 1            # z columns: [gating logits | fc1 hidden | const 1]
    ONE = C1 - 1               # index of the constant-1 column
    W2C = 512                  # mu/numer at cols [0:ND), logvar/denom at [256:256+ND)
    comb_lo, comb_hi = num_full * D, (num_full + num_comb) * D
    groups = [(0, num_full), (num_full, num_full + num_comb),
              (num_full + num_comb, N)]

    f = lambda a: np.asarray(a, np.float32)

    # ---- x-side fused weight: one matmul yields [logits | h_pre | 1] -------
    wx = np.zeros((D + 2, C1), np.float32)
    wg = np.concatenate([f(params["wg_full"]), f(params["wg_comb"]),
                         f(params["wg_spec"])], axis=0).T          # (D, N)
    bg = np.concatenate([f(params["bg_full"]), f(params["bg_comb"]),
                         f(params["bg_spec"])], axis=0)             # (N,)
    wx[:D, :N] = wg
    wx[:D, N:N + ND] = np.transpose(f(params["w1"]), (1, 0, 2)).reshape(D, ND)
    # row D is the mask_mean slot (zero weights); row D+1 is driven by the
    # constant-1 column of x_aug and carries every bias + keeps z[:, ONE] == 1.
    wx[D + 1, :N] = bg
    wx[D + 1, N:N + ND] = f(params["b1"]).reshape(ND)
    wx[D + 1, ONE] = 1.0

    # ---- gate numerator-broadcast and group-sum-broadcast, fused ------------
    # Only the N gating columns of e have nonzero rows; hidden / const columns
    # of exp(z - m) therefore cannot leak into the gates.
    wrg = np.zeros((C1, W2C), np.float32)
    for g in range(N):
        wrg[g, g * D:(g + 1) * D] = 1.0                       # numerator -> own lanes
        lo, hi = next(gr for gr in groups if gr[0] <= g < gr[1])
        wrg[g, 256 + lo * D:256 + hi * D] = 1.0               # group sum -> group lanes

    # ---- stage-2 block-diagonal weights, mu ‖ logvar fused -------------------
    w2 = np.zeros((C1, W2C), np.float32)
    wmu, wlv = f(params["wmu"]), f(params["wlv"])
    for e in range(N):
        w2[N + e * D:N + (e + 1) * D, e * D:(e + 1) * D] = wmu[e]
        w2[N + e * D:N + (e + 1) * D, 256 + e * D:256 + (e + 1) * D] = wlv[e]
    w2[ONE, :ND] = f(params["bmu"]).reshape(ND)                # biases via relu(1)=1
    w2[ONE, 256:256 + ND] = f(params["blv"]).reshape(ND)
    # rows [0:N) stay zero so relu'd gating logits never reach stage 2.

    # ---- sum-over-experts reduction matrix, lane-padded to 128 ---------------
    sm = np.zeros((ND, 128), np.float32)
    for e in range(N):
        sm[e * D:(e + 1) * D, :D] = np.eye(D, dtype=np.float32)

    consts = tuple(jnp.asarray(a) for a in (wx, wrg, w2, sm))

    # ------------------------------------------------------------------------
    def kernel(x_ref, wx_ref, wrg_ref, w2_ref, sm_ref, out_ref):
        f32 = jnp.float32
        Bp = x_ref.shape[0]
        xa = x_ref[...]                                              # (Bp, D+2)

        # MM1: gating logits + all experts' fc1 pre-activations + const-1 col.
        z = jnp.dot(xa, wx_ref[...], preferred_element_type=f32)    # (Bp, C1)

        # GatingNetwork per group (variance=None path): grouped softmax(fc(x)).
        # Row max over ALL columns is row-constant -> cancels within each group,
        # and bounds exp() <= 1 so nothing non-finite enters the next matmul.
        m = jnp.max(z, axis=-1, keepdims=True)
        ez = jnp.exp(z - m)
        # MM2: [per-lane gate numerator | per-lane group-softmax denominator].
        rg = jnp.dot(ez, wrg_ref[...], preferred_element_type=f32)  # (Bp, 512)
        numer = rg[:, :ND]
        denom = rg[:, 256:256 + ND]

        # combination-expert gates are scaled by (1 - mask_mean); mask_mean
        # rides in column D of x_aug, comb lanes selected with an iota mask.
        mm = xa[:, D:D + 1]                                          # (Bp, 1)
        lane = jax.lax.broadcasted_iota(jnp.int32, (Bp, ND), 1)
        comb = (lane >= comb_lo) & (lane < comb_hi)
        scale = jnp.where(comb, 1.0 - mm, 1.0)
        gate_b = numer * pl.reciprocal(denom, approx=True) * scale   # (Bp, ND)

        # MM3: all experts' fc_mu / fc_logvar via one block-diagonal matmul.
        h = jnp.maximum(z, 0.0)            # gating/const cols hit zero rows in w2
        ml = jnp.dot(h, w2_ref[...], preferred_element_type=f32)     # (Bp, 512)
        mu = ml[:, :ND]
        lv = ml[:, 256:256 + ND]

        # Product-of-experts fusion; both reductions over experts share MM4.
        prec = pl.reciprocal(jnp.exp(lv) + 1e-8, approx=True)        # (Bp, ND)
        num = mu * gate_b * prec
        stacked = jnp.concatenate([prec, num], axis=0)               # (2Bp, ND)
        sums = jnp.dot(stacked, sm_ref[...], preferred_element_type=f32)  # (2Bp,128)
        prec_sum = sums[:Bp, :]
        num_sum = sums[Bp:, :]

        var = 1.0 / prec_sum               # exact recip: tightest error spot
        out_ref[:Bp, :] = num_sum * var                    # mu_fused rows
        out_ref[Bp:, :] = jnp.log(var + 1e-8)              # logvar_fused rows

    # ------------------------------------------------------------------------
    @jax.jit
    def forward(x, modality_mask):
        B = x.shape[0]
        Bp = -(-B // 8) * 8                                   # sublane multiple
        mask_mean = jnp.mean(modality_mask.astype(jnp.float32),
                             axis=1, keepdims=True)           # (B, 1)
        x_aug = jnp.concatenate(
            [x.astype(jnp.float32), mask_mean, jnp.ones((B, 1), jnp.float32)],
            axis=1)                                           # (B, D+2)
        x_aug = jnp.pad(x_aug, ((0, Bp - B), (0, 0)))

        out = pl.pallas_call(
            kernel,
            out_shape=jax.ShapeDtypeStruct((2 * Bp, 128), jnp.float32),
            in_specs=[pl.BlockSpec(memory_space=pltpu.MemorySpace.VMEM)] * 5,
            out_specs=pl.BlockSpec(memory_space=pltpu.MemorySpace.VMEM),
        )(x_aug, *consts)

        return out[:B, :D], out[Bp:Bp + B, :D]

    return forward


# --------------------------------------------------------------------------
# Parameters + pure-JAX reference (matches the PyTorch forward).
# --------------------------------------------------------------------------
def init_params(key, embed_dim, num_full, num_comb, num_spec):
    D = embed_dim
    N = num_full + num_comb + num_spec
    ks = jax.random.split(key, 12)
    s = 0.1
    return {
        # expert weights stored (in, out) so the math is x @ W
        "w1":  s * jax.random.normal(ks[0], (N, D, D), jnp.float32),
        "b1":  s * jax.random.normal(ks[1], (N, D), jnp.float32),
        "wmu": s * jax.random.normal(ks[2], (N, D, D), jnp.float32),
        "bmu": s * jax.random.normal(ks[3], (N, D), jnp.float32),
        "wlv": s * jax.random.normal(ks[4], (N, D, D), jnp.float32),
        "blv": s * jax.random.normal(ks[5], (N, D), jnp.float32),
        # GatingNetwork linears (torch convention: weight (out, in) + bias)
        "wg_full": s * jax.random.normal(ks[6], (num_full, D), jnp.float32),
        "bg_full": s * jax.random.normal(ks[7], (num_full,), jnp.float32),
        "wg_comb": s * jax.random.normal(ks[8], (num_comb, D), jnp.float32),
        "bg_comb": s * jax.random.normal(ks[9], (num_comb,), jnp.float32),
        "wg_spec": s * jax.random.normal(ks[10], (num_spec, D), jnp.float32),
        "bg_spec": s * jax.random.normal(ks[11], (num_spec,), jnp.float32),
    }


def compute_gate_weights(x, modality_mask, params):
    """GatingNetwork per group (variance=None): softmax(fc(x)); comb scaled by (1-mask_mean)."""
    gf = jax.nn.softmax(x @ params["wg_full"].T + params["bg_full"], axis=-1)
    gc = jax.nn.softmax(x @ params["wg_comb"].T + params["bg_comb"], axis=-1)
    gs = jax.nn.softmax(x @ params["wg_spec"].T + params["bg_spec"], axis=-1)
    mask_mean = jnp.mean(modality_mask.astype(jnp.float32), axis=1, keepdims=True)
    gc = gc * (1.0 - mask_mean)
    return jnp.concatenate([gf, gc, gs], axis=-1)          # (B, N)


def reference_forward(x, modality_mask, params):
    hp = jax.lax.Precision.HIGHEST
    gate = compute_gate_weights(x, modality_mask, params)  # (B, N)
    N = params["w1"].shape[0]
    mu_list, prec_list = [], []
    for i in range(N):
        h = jax.nn.relu(jnp.dot(x, params["w1"][i], precision=hp) + params["b1"][i])
        mu = jnp.dot(h, params["wmu"][i], precision=hp) + params["bmu"][i]
        lv = jnp.dot(h, params["wlv"][i], precision=hp) + params["blv"][i]
        mu_list.append(mu * gate[:, i:i + 1])
        prec_list.append(1.0 / (jnp.exp(lv) + 1e-8))
    prec_sum = sum(prec_list)
    var_fused = 1.0 / prec_sum
    mu_fused = sum(m * p for m, p in zip(mu_list, prec_list)) / prec_sum
    lv_fused = jnp.log(var_fused * 1.0 + 1e-8)
    return mu_fused, lv_fused


if __name__ == "__main__":
    # TODO(synk): GatingNetwork's Bayesian confidence branch (variance is not
    # None) is never exercised by this model path, so it is not emitted.
    embed_dim = 32
    num_full, num_comb, num_spec = 2, 3, 2
    batch, num_modalities = 4, 3

    key = jax.random.PRNGKey(0)
    kx, km, kp = jax.random.split(key, 3)
    x = jax.random.normal(kx, (batch, embed_dim), jnp.float32)
    modality_mask = (jax.random.uniform(km, (batch, num_modalities)) > 0.5).astype(
        jnp.float32)
    params = init_params(kp, embed_dim, num_full, num_comb, num_spec)

    # One-time packing (hoisted out of the forward path), then the jitted forward.
    forward = build_gating_poe(params, embed_dim, num_full, num_comb, num_spec)

    mu, logvar = forward(x, modality_mask)
    mu, logvar = jax.block_until_ready((mu, logvar))

    mu_ref, logvar_ref = reference_forward(x, modality_mask, params)
    assert mu.shape == (batch, embed_dim) and logvar.shape == (batch, embed_dim)
    assert jnp.allclose(mu, mu_ref, rtol=2e-3, atol=2e-3), "mu mismatch"
    assert jnp.allclose(logvar, logvar_ref, rtol=2e-3, atol=2e-3), "logvar mismatch"
    print("KERNEL_OK")
</pallas_src>

<mosaic_0001>
module attributes {stable_mosaic.version = 11 : i64} {
  func.func @kernel(%arg0: memref<8x34xf32, #tpu.memory_space<vmem>>, %arg1: memref<34x232xf32, #tpu.memory_space<vmem>>, %arg2: memref<232x512xf32, #tpu.memory_space<vmem>>, %arg3: memref<232x512xf32, #tpu.memory_space<vmem>>, %arg4: memref<224x128xf32, #tpu.memory_space<vmem>>, %arg5: memref<16x128xf32, #tpu.memory_space<vmem>>) attributes {dimension_semantics = [], scalar_prefetch = 0 : i64, scratch_operands = 0 : i64, tpu.core_type = #tpu.core_type<tc>} {
    %c0 = arith.constant 0 : index
    %c0_0 = arith.constant 0 : index
    %0 = vector.load %arg0[%c0, %c0_0] : memref<8x34xf32, #tpu.memory_space<vmem>>, vector<8x34xf32>
    %c0_1 = arith.constant 0 : index
    %c0_2 = arith.constant 0 : index
    %1 = vector.load %arg1[%c0_1, %c0_2] : memref<34x232xf32, #tpu.memory_space<vmem>>, vector<34x232xf32>
    %cst = arith.constant dense<0.000000e+00> : vector<8x232xf32>
    %2 = tpu.matmul %0, %1, %cst {dimension_numbers = #tpu.dot_dimension_numbers<[1], [0], [0], [1], [0, 0, 1, 1], [], []>} : vector<8x34xf32>, vector<34x232xf32>, vector<8x232xf32> -> vector<8x232xf32>
    %cst_3 = arith.constant dense<0xFF800000> : vector<8xf32>
    %3 = vector.multi_reduction <maximumf>, %2, %cst_3 [1] : vector<8x232xf32> to vector<8xf32>
    %4 = vector.shape_cast %3 : vector<8xf32> to vector<8x1xf32>
    %5 = vector.broadcast %4 : vector<8x1xf32> to vector<8x232xf32>
    %6 = arith.subf %2, %5 : vector<8x232xf32>
    %7 = math.exp %6 : vector<8x232xf32>
    %c0_4 = arith.constant 0 : index
    %c0_5 = arith.constant 0 : index
    %8 = vector.load %arg2[%c0_4, %c0_5] : memref<232x512xf32, #tpu.memory_space<vmem>>, vector<232x512xf32>
    %cst_6 = arith.constant dense<0.000000e+00> : vector<8x512xf32>
    %9 = tpu.matmul %7, %8, %cst_6 {dimension_numbers = #tpu.dot_dimension_numbers<[1], [0], [0], [1], [0, 0, 1, 1], [], []>} : vector<8x232xf32>, vector<232x512xf32>, vector<8x512xf32> -> vector<8x512xf32>
    %10 = vector.extract_strided_slice %9 {offsets = [0, 0], sizes = [8, 224], strides = [1, 1]} : vector<8x512xf32> to vector<8x224xf32>
    %11 = vector.extract_strided_slice %9 {offsets = [0, 256], sizes = [8, 224], strides = [1, 1]} : vector<8x512xf32> to vector<8x224xf32>
    %12 = vector.extract_strided_slice %0 {offsets = [0, 32], sizes = [8, 1], strides = [1, 1]} : vector<8x34xf32> to vector<8x1xf32>
    %13 = tpu.iota {dimensions = array<i32: 1>} : vector<8x224xi32>
    %c64_i32 = arith.constant 64 : i32
    %14 = vector.broadcast %c64_i32 : i32 to vector<8x224xi32>
    %15 = arith.cmpi sge, %13, %14 : vector<8x224xi32>
    %c160_i32 = arith.constant 160 : i32
    %16 = vector.broadcast %c160_i32 : i32 to vector<8x224xi32>
    %17 = arith.cmpi slt, %13, %16 : vector<8x224xi32>
    %18 = arith.andi %15, %17 : vector<8x224xi1>
    %cst_7 = arith.constant 1.000000e+00 : f32
    %19 = vector.broadcast %cst_7 : f32 to vector<8x1xf32>
    %20 = arith.subf %19, %12 : vector<8x1xf32>
    %cst_8 = arith.constant 1.000000e+00 : f32
    %21 = vector.shape_cast %20 : vector<8x1xf32> to vector<8x1xf32>
    %22 = vector.broadcast %21 : vector<8x1xf32> to vector<8x224xf32>
    %23 = vector.broadcast %cst_8 : f32 to vector<8x224xf32>
    %24 = arith.select %18, %22, %23 : vector<8x224xi1>, vector<8x224xf32>
    %25 = tpu.reciprocal %11 {approx = true} : vector<8x224xf32> -> vector<8x224xf32>
    %26 = arith.mulf %10, %25 : vector<8x224xf32>
    %27 = arith.mulf %26, %24 : vector<8x224xf32>
    %cst_9 = arith.constant 0.000000e+00 : f32
    %28 = vector.broadcast %cst_9 : f32 to vector<8x232xf32>
    %29 = arith.maximumf %2, %28 : vector<8x232xf32>
    %c0_10 = arith.constant 0 : index
    %c0_11 = arith.constant 0 : index
    %30 = vector.load %arg3[%c0_10, %c0_11] : memref<232x512xf32, #tpu.memory_space<vmem>>, vector<232x512xf32>
    %cst_12 = arith.constant dense<0.000000e+00> : vector<8x512xf32>
    %31 = tpu.matmul %29, %30, %cst_12 {dimension_numbers = #tpu.dot_dimension_numbers<[1], [0], [0], [1], [0, 0, 1, 1], [], []>} : vector<8x232xf32>, vector<232x512xf32>, vector<8x512xf32> -> vector<8x512xf32>
    %32 = vector.extract_strided_slice %31 {offsets = [0, 0], sizes = [8, 224], strides = [1, 1]} : vector<8x512xf32> to vector<8x224xf32>
    %33 = vector.extract_strided_slice %31 {offsets = [0, 256], sizes = [8, 224], strides = [1, 1]} : vector<8x512xf32> to vector<8x224xf32>
    %34 = math.exp %33 : vector<8x224xf32>
    %cst_13 = arith.constant 9.99999993E-9 : f32
    %35 = vector.broadcast %cst_13 : f32 to vector<8x224xf32>
    %36 = arith.addf %34, %35 : vector<8x224xf32>
    %37 = tpu.reciprocal %36 {approx = true} : vector<8x224xf32> -> vector<8x224xf32>
    %38 = arith.mulf %32, %27 : vector<8x224xf32>
    %39 = arith.mulf %38, %37 : vector<8x224xf32>
    %40 = tpu.concatenate %37, %39 in 0 : vector<8x224xf32>, vector<8x224xf32> -> vector<16x224xf32>
    %c0_14 = arith.constant 0 : index
    %c0_15 = arith.constant 0 : index
    %41 = vector.load %arg4[%c0_14, %c0_15] : memref<224x128xf32, #tpu.memory_space<vmem>>, vector<224x128xf32>
    %cst_16 = arith.constant dense<0.000000e+00> : vector<16x128xf32>
    %42 = tpu.matmul %40, %41, %cst_16 {dimension_numbers = #tpu.dot_dimension_numbers<[1], [0], [0], [1], [0, 0, 1, 1], [], []>} : vector<16x224xf32>, vector<224x128xf32>, vector<16x128xf32> -> vector<16x128xf32>
    %43 = vector.extract_strided_slice %42 {offsets = [0, 0], sizes = [8, 128], strides = [1, 1]} : vector<16x128xf32> to vector<8x128xf32>
    %44 = vector.extract_strided_slice %42 {offsets = [8, 0], sizes = [8, 128], strides = [1, 1]} : vector<16x128xf32> to vector<8x128xf32>
    %cst_17 = arith.constant 1.000000e+00 : f32
    %45 = vector.broadcast %cst_17 : f32 to vector<8x128xf32>
    %46 = arith.divf %45, %43 : vector<8x128xf32>
    %47 = arith.mulf %44, %46 : vector<8x128xf32>
    %c0_18 = arith.constant 0 : index
    %c0_19 = arith.constant 0 : index
    %48 = vector.load %arg5[%c0_18, %c0_19] : memref<16x128xf32, #tpu.memory_space<vmem>>, vector<8x128xf32>
    tpu.vector_store %arg5[%c0_18, %c0_19], %47 {strides = array<i32>} : memref<16x128xf32, #tpu.memory_space<vmem>>, vector<8x128xf32>,
    %cst_20 = arith.constant 9.99999993E-9 : f32
    %49 = vector.broadcast %cst_20 : f32 to vector<8x128xf32>
    %50 = arith.addf %46, %49 : vector<8x128xf32>
    %51 = math.log %50 : vector<8x128xf32>
    %c8 = arith.constant 8 : index
    %c0_21 = arith.constant 0 : index
    %52 = vector.load %arg5[%c8, %c0_21] : memref<16x128xf32, #tpu.memory_space<vmem>>, vector<8x128xf32>
    tpu.vector_store %arg5[%c8, %c0_21], %51 {strides = array<i32>} : memref<16x128xf32, #tpu.memory_space<vmem>>, vector<8x128xf32>,
    return
  }
}

</mosaic_0001>

<llo_original>
// kernel: forward.1
$region0: #{forward.1}
  #allocation0 [shape = 'u32[]', space=smem, size = 0x4, offset = 0x4, fixed_abs, tag = 'smem constant byte address 0x4 - core index']
  #allocation1 [shape = 'u32[144,128]{1,0:T(1,128)}', space=vmem, size = 0x12000, scoped, tag = 'internal scratch']
  %s0 = inlined_call_operand.vmem [shape: f32[8,34], index: 0, kind: input, shape index: {}]
  %s1 = inlined_call_operand.hbm [shape: f32[34,232], index: 1, kind: input, shape index: {}]
  %s2 = inlined_call_operand.hbm [shape: f32[232,512], index: 2, kind: input, shape index: {}]
  %s3 = inlined_call_operand.hbm [shape: f32[232,512], index: 3, kind: input, shape index: {}]
  %s4 = inlined_call_operand.hbm [shape: f32[224,128], index: 4, kind: input, shape index: {}]
  %s5 = inlined_call_operand.vmem [shape: f32[16,128], index: 5, kind: output, shape index: {}]
  %s6 = sld [smem:[#allocation0]]
  $region46: #{forward.1} parent=0
    _
  %s8 = ssub.s32 1, %s6
  %s9 = scalar_select 0, %s8, %s6
  $region1: #{forward.1} parent=0
    #allocation2 [shape = 'u8[40960]{0}', space=vmem, size = 0xa000, scoped, tag = 'input window, operand 1, single buffered']
    #allocation3 [shape = 's32[1]{0}', space=sflag, size = 0x4, scoped, tag = 'scoped memory for forward.1']
    #allocation4 [shape = 'u8[475136]{0}', space=vmem, size = 0x74000, scoped, tag = 'input window, operand 2, single buffered']
    #allocation5 [shape = 's32[1]{0}', space=sflag, size = 0x4, scoped, tag = 'scoped memory for forward.1']
    #allocation6 [shape = 'u8[475136]{0}', space=vmem, size = 0x74000, scoped, tag = 'input window, operand 3, single buffered']
    #allocation7 [shape = 'u8[114688]{0}', space=vmem, size = 0x1c000, scoped, tag = 'input window, operand 4, single buffered']
    #allocation8 [shape = 's32[1]{0}', space=sflag, size = 0x4, scoped, tag = 'scoped memory for forward.1']
    %10 = vsyncpa [#allocation3], 0
    %11 = vsyncpa [#allocation5], 0
    %12 = vsyncpa [#allocation8], 0
    // Predicated region
    $region2: #{forward.1} parent=1 // pred_check
      _
    $region3: #{forward.1} parent=1 // pred_check_branch
      %14 = sbr.rel (0) target = $region5
    $region4: #{forward.1} parent=1 // pred_region
      _
    $region5: #{forward.1} parent=1 // pred_fallthru
      _
    // Predicated region
    $region6: #{forward.1} parent=1 // pred_check
      _
    $region7: #{forward.1} parent=1 // pred_check_branch
      %16 = sbr.rel (0) target = $region9
    $region8: #{forward.1} parent=1 // pred_region
      %s18 = ssub.s32 1280, 1280
      %19 = vsyncadd [#allocation3], %s18
      %s20 = sshll.u32 [#allocation2], 4
      %s21 = int_to_ptr.vmem [resolvable:$true] %s20
      %26 = dma.hbm_to_vmem [thread:$0]  %s1, 1280, %s21, [#allocation3], 256, 256, 16
    $region9: #{forward.1} parent=1 // pred_fallthru
      _
    // Predicated region
    $region10: #{forward.1} parent=1 // pred_check
      _
    $region11: #{forward.1} parent=1 // pred_check_branch
      %28 = sbr.rel (0) target = $region13
    $region12: #{forward.1} parent=1 // pred_region
      %s30 = ssub.s32 14848, 14848
      %31 = vsyncadd [#allocation5], %s30
      %s32 = sshll.u32 [#allocation4], 4
      %s33 = int_to_ptr.vmem [resolvable:$true] %s32
      %38 = dma.hbm_to_vmem [thread:$0]  %s2, 14848, %s33, [#allocation5], 512, 512, 32
    $region13: #{forward.1} parent=1 // pred_fallthru
      _
    // Predicated region
    $region14: #{forward.1} parent=1 // pred_check
      _
    $region15: #{forward.1} parent=1 // pred_check_branch
      %40 = sbr.rel (0) target = $region17
    $region16: #{forward.1} parent=1 // pred_region
      %s42 = ssub.s32 14848, 14848
      %43 = vsyncadd [#allocation5], %s42
      %s44 = sshll.u32 [#allocation6], 4
      %s45 = int_to_ptr.vmem [resolvable:$true] %s44
      %50 = dma.hbm_to_vmem [thread:$0]  %s3, 14848, %s45, [#allocation5], 512, 512, 32
    $region17: #{forward.1} parent=1 // pred_fallthru
      _
    // Predicated region
    $region18: #{forward.1} parent=1 // pred_check
      _
    $region19: #{forward.1} parent=1 // pred_check_branch
      %52 = sbr.rel (0) target = $region21
    $region20: #{forward.1} parent=1 // pred_region
      %s54 = ssub.s32 3584, 3584
      %55 = vsyncadd [#allocation8], %s54
      %s56 = sshll.u32 [#allocation7], 4
      %s57 = int_to_ptr.vmem [resolvable:$true] %s56
      %62 = dma.hbm_to_vmem [thread:$0]  %s4, 3584, %s57, [#allocation8], 128, 128, 8
    $region21: #{forward.1} parent=1 // pred_fallthru
      _
    // Predicated region
    $region22: #{forward.1} parent=1 // pred_check
      _
    $region23: #{forward.1} parent=1 // pred_check_branch
      %64 = sbr.rel (0) target = $region25
    $region24: #{forward.1} parent=1 // pred_region
      %65 = dma.done [#allocation3], 1280
    $region25: #{forward.1} parent=1 // pred_fallthru
      _
    // Predicated region
    $region26: #{forward.1} parent=1 // pred_check
      _
    $region27: #{forward.1} parent=1 // pred_check_branch
      %67 = sbr.rel (0) target = $region29
    $region28: #{forward.1} parent=1 // pred_region
      %68 = dma.done [#allocation5], 14848
    $region29: #{forward.1} parent=1 // pred_fallthru
      _
    // Predicated region
    $region30: #{forward.1} parent=1 // pred_check
      _
    $region31: #{forward.1} parent=1 // pred_check_branch
      %70 = sbr.rel (0) target = $region33
    $region32: #{forward.1} parent=1 // pred_region
      %71 = dma.done [#allocation5], 14848
    $region33: #{forward.1} parent=1 // pred_fallthru
      _
    // Predicated region
    $region34: #{forward.1} parent=1 // pred_check
      _
    $region35: #{forward.1} parent=1 // pred_check_branch
      %73 = sbr.rel (0) target = $region37
    $region36: #{forward.1} parent=1 // pred_region
      %74 = dma.done [#allocation8], 3584
    $region37: #{forward.1} parent=1 // pred_fallthru
      _
    %v75 = vld [vmem:[%s0] sm:$0xff]
    %v76 = vld [vmem:[#allocation2] sm:$0xff]
    %v77 = vld [vmem:[#allocation2 + $0x8] sm:$0xff]
    %v78 = vld [vmem:[#allocation2 + $0x10] sm:$0xff]
    %v79 = vld [vmem:[#allocation2 + $0x18] sm:$0xff]
    %v80 = vld [vmem:[#allocation2 + $0x20] sm:$0xff]
    %v81 = vld [vmem:[#allocation2 + $0x28] sm:$0xff]
    %v82 = vld [vmem:[#allocation2 + $0x30] sm:$0xff]
    %v83 = vld [vmem:[#allocation2 + $0x38] sm:$0xff]
    %v84 = vld [vmem:[#allocation2 + $0x40] sm:$0x3]
    %v85 = vld [vmem:[#allocation2 + $0x48] sm:$0x3]
    %vm86 = vcmask 277504
    %v88 = vsel %vm86, %v75, 0
    %vm90 = vcmask 1041408
    %v92 = vsel %vm90, %v84, 0
    %v95 = vsel %vm90, %v85, 0
    %97 = vmatprep.subr.mxu0 %v77
    %98 = vmatpush1.msra.mxu0 %v76
    %99 = vmatprep.subr.mxu0 %v79
    %100 = vmatpush1.msra.mxu0 %v78
    %101 = vmatprep.subr.mxu0 %v81
    %102 = vmatpush1.msra.mxu0 %v80
    %103 = vmatprep.subr.mxu0 %v83
    %104 = vmatpush1.msra.mxu0 %v82
    %105 = vmatprep.subr.mxu0 %v95
    %106 = vmatpush1.msra.mxu0 %v92
    %107 = vmatprep.subr.mxu0 0.0
    %108 = vmatpush1.msra.mxu0 0.0
    %109 = vmatprep.subr.mxu0 0.0
    %110 = vmatpush1.msra.mxu0 0.0
    %111 = vmatprep.subr.mxu0 0.0
    %112 = vmatpush1.msra.mxu0 0.0
    %113 = vmatprep.subr.mxu0 0.0
    %114 = vmatpush1.msra.mxu0 0.0
    %115 = vmatprep.subr.mxu0 0.0
    %116 = vmatpush1.msra.mxu0 0.0
    %117 = vmatprep.subr.mxu0 0.0
    %118 = vmatpush1.msra.mxu0 0.0
    %119 = vmatprep.subr.mxu0 0.0
    %120 = vmatpush1.msra.mxu0 0.0
    %121 = vmatprep.subr.mxu0 0.0
    %122 = vmatpush1.msra.mxu0 0.0
    %123 = vmatprep.subr.mxu0 0.0
    %124 = vmatpush1.msra.mxu0 0.0
    %125 = vmatprep.subr.mxu0 0.0
    %126 = vmatpush1.msra.mxu0 0.0
    %127 = vmatprep.subr.mxu0 0.0
    %128 = vmatpush1.msra.mxu0 0.0
    %129 = vmatprep.subr.mxu0 0.0
    %130 = vmatpush1.msra.mxu0 0.0
    %131 = vmatprep.subr.mxu0 0.0
    %132 = vmatpush1.msra.mxu0 0.0
    %133 = vmatprep.subr.mxu0 0.0
    %134 = vmatpush1.msra.mxu0 0.0
    %135 = vmatprep.subr.mxu0 0.0
    %136 = vmatpush1.msra.mxu0 0.0
    %137 = vmatprep.subr.mxu0 0.0
    %138 = vmatpush1.msra.mxu0 0.0
    %139 = vmatprep.subr.mxu0 0.0
    %140 = vmatpush1.msra.mxu0 0.0
    %141 = vmatprep.subr.mxu0 0.0
    %142 = vmatpush1.msra.mxu0 0.0
    %143 = vmatprep.subr.mxu0 0.0
    %144 = vmatpush1.msra.mxu0 0.0
    %145 = vmatprep.subr.mxu0 0.0
    %146 = vmatpush1.msra.mxu0 0.0
    %147 = vmatprep.subr.mxu0 0.0
    %148 = vmatpush1.msra.mxu0 0.0
    %149 = vmatprep.subr.mxu0 0.0
    %150 = vmatpush1.msra.mxu0 0.0
    %151 = vmatprep.subr.mxu0 0.0
    %152 = vmatpush1.msra.mxu0 0.0
    %153 = vmatprep.subr.mxu0 0.0
    %154 = vmatpush1.msra.mxu0 0.0
    %155 = vmatprep.subr.mxu0 0.0
    %156 = vmatpush1.msra.mxu0 0.0
    %157 = vmatprep.subr.mxu0 0.0
    %158 = vmatpush1.msra.mxu0 0.0
    %159 = vmatprep.subr.mxu0 0.0
    %160 = vmatpush1.msra.mxu0 0.0
    %161 = vmatprep.mubr.f32.mxu0 0.0
    %162 = vmatmul.mubr.f32.gmra.mrb[0].mxu0 %v88
    %v163 = vpop.f32.mrb[0].mxu0
    %v164 = vadd.f32 0.0, %v163
    %v165 = vpop.f32.mrb[0].mxu0
    %v166 = vadd.f32 0.0, %v165
    %167 = vdwg.mxu0
    %vm168 = vcmask 850944
    %v169 = vsel %vm168, %v166, -inf
    %v170 = vmax.f32 %v164, %v169
    %171 = vmax.xlane.f32.xlu0 %v170
    %v172 = vpop.xlane.xlu0 %171
    %v173 = vsub.f32 %v164, %v172
    %v174 = vsub.f32 %v166, %v172
    %v175 = vmul.f32 %v173, 1.442695
    %v176 = vpow.pop %v175
    %v177 = vmul.f32 %v174, 1.442695
    %v178 = vpow.pop %v177
    %v179 = vld [vmem:[#allocation4] sm:$0xff]
    %v180 = vld [vmem:[#allocation4 + $0x8] sm:$0xff]
    %v181 = vld [vmem:[#allocation4 + $0x10] sm:$0xff]
    %v182 = vld [vmem:[#allocation4 + $0x18] sm:$0xff]
    %v183 = vld [vmem:[#allocation4 + $0x20] sm:$0xff]
    %v184 = vld [vmem:[#allocation4 + $0x28] sm:$0xff]
    %v185 = vld [vmem:[#allocation4 + $0x30] sm:$0xff]
    %v186 = vld [vmem:[#allocation4 + $0x38] sm:$0xff]
    %v187 = vld [vmem:[#allocation4 + $0x40] sm:$0xff]
    %v188 = vld [vmem:[#allocation4 + $0x48] sm:$0xff]
    %v189 = vld [vmem:[#allocation4 + $0x50] sm:$0xff]
    %v190 = vld [vmem:[#allocation4 + $0x58] sm:$0xff]
    %v191 = vld [vmem:[#allocation4 + $0x60] sm:$0xff]
    %v192 = vld [vmem:[#allocation4 + $0x68] sm:$0xff]
    %v193 = vld [vmem:[#allocation4 + $0x70] sm:$0xff]
    %v194 = vld [vmem:[#allocation4 + $0x78] sm:$0xff]
    %v195 = vld [vmem:[#allocation4 + $0x80] sm:$0xff]
    %v196 = vld [vmem:[#allocation4 + $0x88] sm:$0xff]
    %v197 = vld [vmem:[#allocation4 + $0x90] sm:$0xff]
    %v198 = vld [vmem:[#allocation4 + $0x98] sm:$0xff]
    %v199 = vld [vmem:[#allocation4 + $0xa0] sm:$0xff]
    %v200 = vld [vmem:[#allocation4 + $0xa8] sm:$0xff]
    %v201 = vld [vmem:[#allocation4 + $0xb0] sm:$0xff]
    %v202 = vld [vmem:[#allocation4 + $0xb8] sm:$0xff]
    %v203 = vld [vmem:[#allocation4 + $0xc0] sm:$0xff]
    %v204 = vld [vmem:[#allocation4 + $0xc8] sm:$0xff]
    %v205 = vld [vmem:[#allocation4 + $0xd0] sm:$0xff]
    %v206 = vld [vmem:[#allocation4 + $0xd8] sm:$0xff]
    %v207 = vld [vmem:[#allocation4 + $0xe0] sm:$0xff]
    %v208 = vld [vmem:[#allocation4 + $0xe8] sm:$0xff]
    %v209 = vld [vmem:[#allocation4 + $0xf0] sm:$0xff]
    %v210 = vld [vmem:[#allocation4 + $0xf8] sm:$0xff]
    %v211 = vld [vmem:[#allocation4 + $0x100] sm:$0xff]
    %v212 = vld [vmem:[#allocation4 + $0x108] sm:$0xff]
    %v213 = vld [vmem:[#allocation4 + $0x110] sm:$0xff]
    %v214 = vld [vmem:[#allocation4 + $0x118] sm:$0xff]
    %v215 = vld [vmem:[#allocation4 + $0x120] sm:$0xff]
    %v216 = vld [vmem:[#allocation4 + $0x128] sm:$0xff]
    %v217 = vld [vmem:[#allocation4 + $0x130] sm:$0xff]
    %v218 = vld [vmem:[#allocation4 + $0x138] sm:$0xff]
    %v219 = vld [vmem:[#allocation4 + $0x140] sm:$0xff]
    %v220 = vld [vmem:[#allocation4 + $0x148] sm:$0xff]
    %v221 = vld [vmem:[#allocation4 + $0x150] sm:$0xff]
    %v222 = vld [vmem:[#allocation4 + $0x158] sm:$0xff]
    %v223 = vld [vmem:[#allocation4 + $0x160] sm:$0xff]
    %v224 = vld [vmem:[#allocation4 + $0x168] sm:$0xff]
    %v225 = vld [vmem:[#allocation4 + $0x170] sm:$0xff]
    %v226 = vld [vmem:[#allocation4 + $0x178] sm:$0xff]
    %v227 = vld [vmem:[#allocation4 + $0x180] sm:$0xff]
    %v228 = vld [vmem:[#allocation4 + $0x188] sm:$0xff]
    %v229 = vld [vmem:[#allocation4 + $0x190] sm:$0xff]
    %v230 = vld [vmem:[#allocation4 + $0x198] sm:$0xff]
    %v231 = vld [vmem:[#allocation4 + $0x1a0] sm:$0xff]
    %v232 = vld [vmem:[#allocation4 + $0x1a8] sm:$0xff]
    %v233 = vld [vmem:[#allocation4 + $0x1b0] sm:$0xff]
    %v234 = vld [vmem:[#allocation4 + $0x1b8] sm:$0xff]
    %v235 = vld [vmem:[#allocation4 + $0x1c0] sm:$0xff]
    %v236 = vld [vmem:[#allocation4 + $0x1c8] sm:$0xff]
    %v237 = vld [vmem:[#allocation4 + $0x1d0] sm:$0xff]
    %v238 = vld [vmem:[#allocation4 + $0x1d8] sm:$0xff]
    %v239 = vld [vmem:[#allocation4 + $0x1e0] sm:$0xff]
    %v240 = vld [vmem:[#allocation4 + $0x1e8] sm:$0xff]
    %v241 = vld [vmem:[#allocation4 + $0x1f0] sm:$0xff]
    %v242 = vld [vmem:[#allocation4 + $0x1f8] sm:$0xff]
    %v243 = vld [vmem:[#allocation4 + $0x200] sm:$0xff]
    %v244 = vld [vmem:[#allocation4 + $0x208] sm:$0xff]
    %v245 = vld [vmem:[#allocation4 + $0x210] sm:$0xff]
    %v246 = vld [vmem:[#allocation4 + $0x218] sm:$0xff]
    %v247 = vld [vmem:[#allocation4 + $0x220] sm:$0xff]
    %v248 = vld [vmem:[#allocation4 + $0x228] sm:$0xff]
    %v249 = vld [vmem:[#allocation4 + $0x230] sm:$0xff]
    %v250 = vld [vmem:[#allocation4 + $0x238] sm:$0xff]
    %v251 = vld [vmem:[#allocation4 + $0x240] sm:$0xff]
    %v252 = vld [vmem:[#allocation4 + $0x248] sm:$0xff]
    %v253 = vld [vmem:[#allocation4 + $0x250] sm:$0xff]
    %v254 = vld [vmem:[#allocation4 + $0x258] sm:$0xff]
    %v255 = vld [vmem:[#allocation4 + $0x260] sm:$0xff]
    %v256 = vld [vmem:[#allocation4 + $0x268] sm:$0xff]
    %v257 = vld [vmem:[#allocation4 + $0x270] sm:$0xff]
    %v258 = vld [vmem:[#allocation4 + $0x278] sm:$0xff]
    %v259 = vld [vmem:[#allocation4 + $0x280] sm:$0xff]
    %v260 = vld [vmem:[#allocation4 + $0x288] sm:$0xff]
    %v261 = vld [vmem:[#allocation4 + $0x290] sm:$0xff]
    %v262 = vld [vmem:[#allocation4 + $0x298] sm:$0xff]
    %v263 = vld [vmem:[#allocation4 + $0x2a0] sm:$0xff]
    %v264 = vld [vmem:[#allocation4 + $0x2a8] sm:$0xff]
    %v265 = vld [vmem:[#allocation4 + $0x2b0] sm:$0xff]
    %v266 = vld [vmem:[#allocation4 + $0x2b8] sm:$0xff]
    %v267 = vld [vmem:[#allocation4 + $0x2c0] sm:$0xff]
    %v268 = vld [vmem:[#allocation4 + $0x2c8] sm:$0xff]
    %v269 = vld [vmem:[#allocation4 + $0x2d0] sm:$0xff]
    %v270 = vld [vmem:[#allocation4 + $0x2d8] sm:$0xff]
    %v271 = vld [vmem:[#allocation4 + $0x2e0] sm:$0xff]
    %v272 = vld [vmem:[#allocation4 + $0x2e8] sm:$0xff]
    %v273 = vld [vmem:[#allocation4 + $0x2f0] sm:$0xff]
    %v274 = vld [vmem:[#allocation4 + $0x2f8] sm:$0xff]
    %v275 = vld [vmem:[#allocation4 + $0x300] sm:$0xff]
    %v276 = vld [vmem:[#allocation4 + $0x308] sm:$0xff]
    %v277 = vld [vmem:[#allocation4 + $0x310] sm:$0xff]
    %v278 = vld [vmem:[#allocation4 + $0x318] sm:$0xff]
    %v279 = vld [vmem:[#allocation4 + $0x320] sm:$0xff]
    %v280 = vld [vmem:[#allocation4 + $0x328] sm:$0xff]
    %v281 = vld [vmem:[#allocation4 + $0x330] sm:$0xff]
    %v282 = vld [vmem:[#allocation4 + $0x338] sm:$0xff]
    %v283 = vld [vmem:[#allocation4 + $0x340] sm:$0xff]
    %v284 = vld [vmem:[#allocation4 + $0x348] sm:$0xff]
    %v285 = vld [vmem:[#allocation4 + $0x350] sm:$0xff]
    %v286 = vld [vmem:[#allocation4 + $0x358] sm:$0xff]
    %v287 = vld [vmem:[#allocation4 + $0x360] sm:$0xff]
    %v288 = vld [vmem:[#allocation4 + $0x368] sm:$0xff]
    %v289 = vld [vmem:[#allocation4 + $0x370] sm:$0xff]
    %v290 = vld [vmem:[#allocation4 + $0x378] sm:$0xff]
    %v291 = vld [vmem:[#allocation4 + $0x380] sm:$0xff]
    %v292 = vld [vmem:[#allocation4 + $0x388] sm:$0xff]
    %v293 = vld [vmem:[#allocation4 + $0x390] sm:$0xff]
    %v294 = vld [vmem:[#allocation4 + $0x398] sm:$0xff]
    %v296 = vsel %vm168, %v178, 0
    %298 = vmatprep.subr.mxu0 %v180
    %299 = vmatpush1.msra.mxu0 %v179
    %300 = vmatprep.subr.mxu0 %v184
    %301 = vmatpush1.msra.mxu0 %v183
    %302 = vmatprep.subr.mxu0 %v188
    %303 = vmatpush1.msra.mxu0 %v187
    %304 = vmatprep.subr.mxu0 %v192
    %305 = vmatpush1.msra.mxu0 %v191
    %306 = vmatprep.subr.mxu0 %v196
    %307 = vmatpush1.msra.mxu0 %v195
    %308 = vmatprep.subr.mxu0 %v200
    %309 = vmatpush1.msra.mxu0 %v199
    %310 = vmatprep.subr.mxu0 %v204
    %311 = vmatpush1.msra.mxu0 %v203
    %312 = vmatprep.subr.mxu0 %v208
    %313 = vmatpush1.msra.mxu0 %v207
    %314 = vmatprep.subr.mxu0 %v212
    %315 = vmatpush1.msra.mxu0 %v211
    %316 = vmatprep.subr.mxu0 %v216
    %317 = vmatpush1.msra.mxu0 %v215
    %318 = vmatprep.subr.mxu0 %v220
    %319 = vmatpush1.msra.mxu0 %v219
    %320 = vmatprep.subr.mxu0 %v224
    %321 = vmatpush1.msra.mxu0 %v223
    %322 = vmatprep.subr.mxu0 %v228
    %323 = vmatpush1.msra.mxu0 %v227
    %324 = vmatprep.subr.mxu0 %v232
    %325 = vmatpush1.msra.mxu0 %v231
    %326 = vmatprep.subr.mxu0 %v236
    %327 = vmatpush1.msra.mxu0 %v235
    %328 = vmatprep.subr.mxu0 %v240
    %329 = vmatpush1.msra.mxu0 %v239
    %330 = vmatprep.subr.mxu0 %v244
    %331 = vmatpush1.msra.mxu0 %v243
    %332 = vmatprep.subr.mxu0 %v248
    %333 = vmatpush1.msra.mxu0 %v247
    %334 = vmatprep.subr.mxu0 %v252
    %335 = vmatpush1.msra.mxu0 %v251
    %336 = vmatprep.subr.mxu0 %v256
    %337 = vmatpush1.msra.mxu0 %v255
    %338 = vmatprep.subr.mxu0 %v260
    %339 = vmatpush1.msra.mxu0 %v259
    %340 = vmatprep.subr.mxu0 %v264
    %341 = vmatpush1.msra.mxu0 %v263
    %342 = vmatprep.subr.mxu0 %v268
    %343 = vmatpush1.msra.mxu0 %v267
    %344 = vmatprep.subr.mxu0 %v272
    %345 = vmatpush1.msra.mxu0 %v271
    %346 = vmatprep.subr.mxu0 %v276
    %347 = vmatpush1.msra.mxu0 %v275
    %348 = vmatprep.subr.mxu0 %v280
    %349 = vmatpush1.msra.mxu0 %v279
    %350 = vmatprep.subr.mxu0 %v284
    %351 = vmatpush1.msra.mxu0 %v283
    %352 = vmatprep.subr.mxu0 %v288
    %353 = vmatpush1.msra.mxu0 %v287
    %354 = vmatprep.subr.mxu0 %v292
    %355 = vmatpush1.msra.mxu0 %v291
    %356 = vmatprep.subr.mxu0 0.0
    %357 = vmatpush1.msra.mxu0 0.0
    %358 = vmatprep.subr.mxu0 0.0
    %359 = vmatpush1.msra.mxu0 0.0
    %360 = vmatprep.subr.mxu0 0.0
    %361 = vmatpush1.msra.mxu0 0.0
    %362 = vmatprep.mubr.f32.mxu0 %v296
    %363 = vmatmul.mubr.f32.gmra.mrb[0].mxu0 %v176
    %v364 = vpop.f32.mrb[0].mxu0
    %v365 = vadd.f32 0.0, %v364
    %v366 = vpop.f32.mrb[0].mxu0
    %v367 = vadd.f32 0.0, %v366
    %368 = vdwg.mxu0
    %369 = vmatprep.subr.mxu0 %v182
    %370 = vmatpush1.msra.mxu0 %v181
    %371 = vmatprep.subr.mxu0 %v186
    %372 = vmatpush1.msra.mxu0 %v185
    %373 = vmatprep.subr.mxu0 %v190
    %374 = vmatpush1.msra.mxu0 %v189
    %375 = vmatprep.subr.mxu0 %v194
    %376 = vmatpush1.msra.mxu0 %v193
    %377 = vmatprep.subr.mxu0 %v198
    %378 = vmatpush1.msra.mxu0 %v197
    %379 = vmatprep.subr.mxu0 %v202
    %380 = vmatpush1.msra.mxu0 %v201
    %381 = vmatprep.subr.mxu0 %v206
    %382 = vmatpush1.msra.mxu0 %v205
    %383 = vmatprep.subr.mxu0 %v210
    %384 = vmatpush1.msra.mxu0 %v209
    %385 = vmatprep.subr.mxu0 %v214
    %386 = vmatpush1.msra.mxu0 %v213
    %387 = vmatprep.subr.mxu0 %v218
    %388 = vmatpush1.msra.mxu0 %v217
    %389 = vmatprep.subr.mxu0 %v222
    %390 = vmatpush1.msra.mxu0 %v221
    %391 = vmatprep.subr.mxu0 %v226
    %392 = vmatpush1.msra.mxu0 %v225
    %393 = vmatprep.subr.mxu0 %v230
    %394 = vmatpush1.msra.mxu0 %v229
    %395 = vmatprep.subr.mxu0 %v234
    %396 = vmatpush1.msra.mxu0 %v233
    %397 = vmatprep.subr.mxu0 %v238
    %398 = vmatpush1.msra.mxu0 %v237
    %399 = vmatprep.subr.mxu0 %v242
    %400 = vmatpush1.msra.mxu0 %v241
    %401 = vmatprep.subr.mxu0 %v246
    %402 = vmatpush1.msra.mxu0 %v245
    %403 = vmatprep.subr.mxu0 %v250
    %404 = vmatpush1.msra.mxu0 %v249
    %405 = vmatprep.subr.mxu0 %v254
    %406 = vmatpush1.msra.mxu0 %v253
    %407 = vmatprep.subr.mxu0 %v258
    %408 = vmatpush1.msra.mxu0 %v257
    %409 = vmatprep.subr.mxu0 %v262
    %410 = vmatpush1.msra.mxu0 %v261
    %411 = vmatprep.subr.mxu0 %v266
    %412 = vmatpush1.msra.mxu0 %v265
    %413 = vmatprep.subr.mxu0 %v270
    %414 = vmatpush1.msra.mxu0 %v269
    %415 = vmatprep.subr.mxu0 %v274
    %416 = vmatpush1.msra.mxu0 %v273
    %417 = vmatprep.subr.mxu0 %v278
    %418 = vmatpush1.msra.mxu0 %v277
    %419 = vmatprep.subr.mxu0 %v282
    %420 = vmatpush1.msra.mxu0 %v281
    %421 = vmatprep.subr.mxu0 %v286
    %422 = vmatpush1.msra.mxu0 %v285
    %423 = vmatprep.subr.mxu0 %v290
    %424 = vmatpush1.msra.mxu0 %v289
    %425 = vmatprep.subr.mxu0 %v294
    %426 = vmatpush1.msra.mxu0 %v293
    %427 = vmatprep.subr.mxu0 0.0
    %428 = vmatpush1.msra.mxu0 0.0
    %429 = vmatprep.subr.mxu0 0.0
    %430 = vmatpush1.msra.mxu0 0.0
    %431 = vmatprep.subr.mxu0 0.0
    %432 = vmatpush1.msra.mxu0 0.0
    %433 = vmatprep.mubr.f32.mxu0 %v296
    %434 = vmatmul.mubr.f32.gmra.mrb[0].mxu0 %v176
    %v435 = vpop.f32.mrb[0].mxu0
    %v436 = vadd.f32 0.0, %v435
    %v437 = vpop.f32.mrb[0].mxu0
    %v438 = vadd.f32 0.0, %v437
    %439 = vdwg.mxu0
    %v440 = vlaneseq
    %v441 = vand.u32 %v440, 127
    %v442 = vadd.s32 %v441, 128
    %vm443 = vcmp.ge.s32.totalorder %v441, 64
    %vm444 = vcmp.ge.s32.totalorder %v442, 64
    %vm445 = vcmp.lt.s32.totalorder %v441, 160
    %vm446 = vcmp.lt.s32.totalorder %v442, 160
    %vm447 = vmand %vm443, %vm445
    %vm448 = vmand %vm444, %vm446
    %v449 = vsub.f32 1.0, %v75
    %451 = vset.pattern.permute.xlu0 32
    %452 = vperm.xlu0 %451, %v449
    %v453 = vpop.permute.xlu0 %452
    %v455 = vsel %vm447, %v453, 1.0
    %v456 = vsel %vm448, %v453, 1.0
    %v457 = vrcp.pop %v436
    %v458 = vrcp.pop %v438
    %v459 = vmul.f32 %v365, %v457
    %v460 = vmul.f32 %v367, %v458
    %v461 = vmul.f32 %v459, %v455
    %v462 = vmul.f32 %v460, %v456
    %v463 = vmax.f32 %v164, 0.0
    %v464 = vmax.f32 %v166, 0.0
    %v465 = vld [vmem:[#allocation6] sm:$0xff]
    %v466 = vld [vmem:[#allocation6 + $0x8] sm:$0xff]
    %v467 = vld [vmem:[#allocation6 + $0x10] sm:$0xff]
    %v468 = vld [vmem:[#allocation6 + $0x18] sm:$0xff]
    %v469 = vld [vmem:[#allocation6 + $0x20] sm:$0xff]
    %v470 = vld [vmem:[#allocation6 + $0x28] sm:$0xff]
    %v471 = vld [vmem:[#allocation6 + $0x30] sm:$0xff]
    %v472 = vld [vmem:[#allocation6 + $0x38] sm:$0xff]
    %v473 = vld [vmem:[#allocation6 + $0x40] sm:$0xff]
    %v474 = vld [vmem:[#allocation6 + $0x48] sm:$0xff]
    %v475 = vld [vmem:[#allocation6 + $0x50] sm:$0xff]
    %v476 = vld [vmem:[#allocation6 + $0x58] sm:$0xff]
    %v477 = vld [vmem:[#allocation6 + $0x60] sm:$0xff]
    %v478 = vld [vmem:[#allocation6 + $0x68] sm:$0xff]
    %v479 = vld [vmem:[#allocation6 + $0x70] sm:$0xff]
    %v480 = vld [vmem:[#allocation6 + $0x78] sm:$0xff]
    %v481 = vld [vmem:[#allocation6 + $0x80] sm:$0xff]
    %v482 = vld [vmem:[#allocation6 + $0x88] sm:$0xff]
    %v483 = vld [vmem:[#allocation6 + $0x90] sm:$0xff]
    %v484 = vld [vmem:[#allocation6 + $0x98] sm:$0xff]
    %v485 = vld [vmem:[#allocation6 + $0xa0] sm:$0xff]
    %v486 = vld [vmem:[#allocation6 + $0xa8] sm:$0xff]
    %v487 = vld [vmem:[#allocation6 + $0xb0] sm:$0xff]
    %v488 = vld [vmem:[#allocation6 + $0xb8] sm:$0xff]
    %v489 = vld [vmem:[#allocation6 + $0xc0] sm:$0xff]
    %v490 = vld [vmem:[#allocation6 + $0xc8] sm:$0xff]
    %v491 = vld [vmem:[#allocation6 + $0xd0] sm:$0xff]
    %v492 = vld [vmem:[#allocation6 + $0xd8] sm:$0xff]
    %v493 = vld [vmem:[#allocation6 + $0xe0] sm:$0xff]
    %v494 = vld [vmem:[#allocation6 + $0xe8] sm:$0xff]
    %v495 = vld [vmem:[#allocation6 + $0xf0] sm:$0xff]
    %v496 = vld [vmem:[#allocation6 + $0xf8] sm:$0xff]
    %v497 = vld [vmem:[#allocation6 + $0x100] sm:$0xff]
    %v498 = vld [vmem:[#allocation6 + $0x108] sm:$0xff]
    %v499 = vld [vmem:[#allocation6 + $0x110] sm:$0xff]
    %v500 = vld [vmem:[#allocation6 + $0x118] sm:$0xff]
    %v501 = vld [vmem:[#allocation6 + $0x120] sm:$0xff]
    %v502 = vld [vmem:[#allocation6 + $0x128] sm:$0xff]
    %v503 = vld [vmem:[#allocation6 + $0x130] sm:$0xff]
    %v504 = vld [vmem:[#allocation6 + $0x138] sm:$0xff]
    %v505 = vld [vmem:[#allocation6 + $0x140] sm:$0xff]
    %v506 = vld [vmem:[#allocation6 + $0x148] sm:$0xff]
    %v507 = vld [vmem:[#allocation6 + $0x150] sm:$0xff]
    %v508 = vld [vmem:[#allocation6 + $0x158] sm:$0xff]
    %v509 = vld [vmem:[#allocation6 + $0x160] sm:$0xff]
    %v510 = vld [vmem:[#allocation6 + $0x168] sm:$0xff]
    %v511 = vld [vmem:[#allocation6 + $0x170] sm:$0xff]
    %v512 = vld [vmem:[#allocation6 + $0x178] sm:$0xff]
    %v513 = vld [vmem:[#allocation6 + $0x180] sm:$0xff]
    %v514 = vld [vmem:[#allocation6 + $0x188] sm:$0xff]
    %v515 = vld [vmem:[#allocation6 + $0x190] sm:$0xff]
    %v516 = vld [vmem:[#allocation6 + $0x198] sm:$0xff]
    %v517 = vld [vmem:[#allocation6 + $0x1a0] sm:$0xff]
    %v518 = vld [vmem:[#allocation6 + $0x1a8] sm:$0xff]
    %v519 = vld [vmem:[#allocation6 + $0x1b0] sm:$0xff]
    %v520 = vld [vmem:[#allocation6 + $0x1b8] sm:$0xff]
    %v521 = vld [vmem:[#allocation6 + $0x1c0] sm:$0xff]
    %v522 = vld [vmem:[#allocation6 + $0x1c8] sm:$0xff]
    %v523 = vld [vmem:[#allocation6 + $0x1d0] sm:$0xff]
    %v524 = vld [vmem:[#allocation6 + $0x1d8] sm:$0xff]
    %v525 = vld [vmem:[#allocation6 + $0x1e0] sm:$0xff]
    %v526 = vld [vmem:[#allocation6 + $0x1e8] sm:$0xff]
    %v527 = vld [vmem:[#allocation6 + $0x1f0] sm:$0xff]
    %v528 = vld [vmem:[#allocation6 + $0x1f8] sm:$0xff]
    %v529 = vld [vmem:[#allocation6 + $0x200] sm:$0xff]
    %v530 = vld [vmem:[#allocation6 + $0x208] sm:$0xff]
    %v531 = vld [vmem:[#allocation6 + $0x210] sm:$0xff]
    %v532 = vld [vmem:[#allocation6 + $0x218] sm:$0xff]
    %v533 = vld [vmem:[#allocation6 + $0x220] sm:$0xff]
    %v534 = vld [vmem:[#allocation6 + $0x228] sm:$0xff]
    %v535 = vld [vmem:[#allocation6 + $0x230] sm:$0xff]
    %v536 = vld [vmem:[#allocation6 + $0x238] sm:$0xff]
    %v537 = vld [vmem:[#allocation6 + $0x240] sm:$0xff]
    %v538 = vld [vmem:[#allocation6 + $0x248] sm:$0xff]
    %v539 = vld [vmem:[#allocation6 + $0x250] sm:$0xff]
    %v540 = vld [vmem:[#allocation6 + $0x258] sm:$0xff]
    %v541 = vld [vmem:[#allocation6 + $0x260] sm:$0xff]
    %v542 = vld [vmem:[#allocation6 + $0x268] sm:$0xff]
    %v543 = vld [vmem:[#allocation6 + $0x270] sm:$0xff]
    %v544 = vld [vmem:[#allocation6 + $0x278] sm:$0xff]
    %v545 = vld [vmem:[#allocation6 + $0x280] sm:$0xff]
    %v546 = vld [vmem:[#allocation6 + $0x288] sm:$0xff]
    %v547 = vld [vmem:[#allocation6 + $0x290] sm:$0xff]
    %v548 = vld [vmem:[#allocation6 + $0x298] sm:$0xff]
    %v549 = vld [vmem:[#allocation6 + $0x2a0] sm:$0xff]
    %v550 = vld [vmem:[#allocation6 + $0x2a8] sm:$0xff]
    %v551 = vld [vmem:[#allocation6 + $0x2b0] sm:$0xff]
    %v552 = vld [vmem:[#allocation6 + $0x2b8] sm:$0xff]
    %v553 = vld [vmem:[#allocation6 + $0x2c0] sm:$0xff]
    %v554 = vld [vmem:[#allocation6 + $0x2c8] sm:$0xff]
    %v555 = vld [vmem:[#allocation6 + $0x2d0] sm:$0xff]
    %v556 = vld [vmem:[#allocation6 + $0x2d8] sm:$0xff]
    %v557 = vld [vmem:[#allocation6 + $0x2e0] sm:$0xff]
    %v558 = vld [vmem:[#allocation6 + $0x2e8] sm:$0xff]
    %v559 = vld [vmem:[#allocation6 + $0x2f0] sm:$0xff]
    %v560 = vld [vmem:[#allocation6 + $0x2f8] sm:$0xff]
    %v561 = vld [vmem:[#allocation6 + $0x300] sm:$0xff]
    %v562 = vld [vmem:[#allocation6 + $0x308] sm:$0xff]
    %v563 = vld [vmem:[#allocation6 + $0x310] sm:$0xff]
    %v564 = vld [vmem:[#allocation6 + $0x318] sm:$0xff]
    %v565 = vld [vmem:[#allocation6 + $0x320] sm:$0xff]
    %v566 = vld [vmem:[#allocation6 + $0x328] sm:$0xff]
    %v567 = vld [vmem:[#allocation6 + $0x330] sm:$0xff]
    %v568 = vld [vmem:[#allocation6 + $0x338] sm:$0xff]
    %v569 = vld [vmem:[#allocation6 + $0x340] sm:$0xff]
    %v570 = vld [vmem:[#allocation6 + $0x348] sm:$0xff]
    %v571 = vld [vmem:[#allocation6 + $0x350] sm:$0xff]
    %v572 = vld [vmem:[#allocation6 + $0x358] sm:$0xff]
    %v573 = vld [vmem:[#allocation6 + $0x360] sm:$0xff]
    %v574 = vld [vmem:[#allocation6 + $0x368] sm:$0xff]
    %v575 = vld [vmem:[#allocation6 + $0x370] sm:$0xff]
    %v576 = vld [vmem:[#allocation6 + $0x378] sm:$0xff]
    %v577 = vld [vmem:[#allocation6 + $0x380] sm:$0xff]
    %v578 = vld [vmem:[#allocation6 + $0x388] sm:$0xff]
    %v579 = vld [vmem:[#allocation6 + $0x390] sm:$0xff]
    %v580 = vld [vmem:[#allocation6 + $0x398] sm:$0xff]
    %v582 = vsel %vm168, %v464, 0
    %584 = vmatprep.subr.mxu0 %v466
    %585 = vmatpush1.msra.mxu0 %v465
    %586 = vmatprep.subr.mxu0 %v470
    %587 = vmatpush1.msra.mxu0 %v469
    %588 = vmatprep.subr.mxu0 %v474
    %589 = vmatpush1.msra.mxu0 %v473
    %590 = vmatprep.subr.mxu0 %v478
    %591 = vmatpush1.msra.mxu0 %v477
    %592 = vmatprep.subr.mxu0 %v482
    %593 = vmatpush1.msra.mxu0 %v481
    %594 = vmatprep.subr.mxu0 %v486
    %595 = vmatpush1.msra.mxu0 %v485
    %596 = vmatprep.subr.mxu0 %v490
    %597 = vmatpush1.msra.mxu0 %v489
    %598 = vmatprep.subr.mxu0 %v494
    %599 = vmatpush1.msra.mxu0 %v493
    %600 = vmatprep.subr.mxu0 %v498
    %601 = vmatpush1.msra.mxu0 %v497
    %602 = vmatprep.subr.mxu0 %v502
    %603 = vmatpush1.msra.mxu0 %v501
    %604 = vmatprep.subr.mxu0 %v506
    %605 = vmatpush1.msra.mxu0 %v505
    %606 = vmatprep.subr.mxu0 %v510
    %607 = vmatpush1.msra.mxu0 %v509
    %608 = vmatprep.subr.mxu0 %v514
    %609 = vmatpush1.msra.mxu0 %v513
    %610 = vmatprep.subr.mxu0 %v518
    %611 = vmatpush1.msra.mxu0 %v517
    %612 = vmatprep.subr.mxu0 %v522
    %613 = vmatpush1.msra.mxu0 %v521
    %614 = vmatprep.subr.mxu0 %v526
    %615 = vmatpush1.msra.mxu0 %v525
    %616 = vmatprep.subr.mxu0 %v530
    %617 = vmatpush1.msra.mxu0 %v529
    %618 = vmatprep.subr.mxu0 %v534
    %619 = vmatpush1.msra.mxu0 %v533
    %620 = vmatprep.subr.mxu0 %v538
    %621 = vmatpush1.msra.mxu0 %v537
    %622 = vmatprep.subr.mxu0 %v542
    %623 = vmatpush1.msra.mxu0 %v541
    %624 = vmatprep.subr.mxu0 %v546
    %625 = vmatpush1.msra.mxu0 %v545
    %626 = vmatprep.subr.mxu0 %v550
    %627 = vmatpush1.msra.mxu0 %v549
    %628 = vmatprep.subr.mxu0 %v554
    %629 = vmatpush1.msra.mxu0 %v553
    %630 = vmatprep.subr.mxu0 %v558
    %631 = vmatpush1.msra.mxu0 %v557
    %632 = vmatprep.subr.mxu0 %v562
    %633 = vmatpush1.msra.mxu0 %v561
    %634 = vmatprep.subr.mxu0 %v566
    %635 = vmatpush1.msra.mxu0 %v565
    %636 = vmatprep.subr.mxu0 %v570
    %637 = vmatpush1.msra.mxu0 %v569
    %638 = vmatprep.subr.mxu0 %v574
    %639 = vmatpush1.msra.mxu0 %v573
    %640 = vmatprep.subr.mxu0 %v578
    %641 = vmatpush1.msra.mxu0 %v577
    %642 = vmatprep.subr.mxu0 0.0
    %643 = vmatpush1.msra.mxu0 0.0
    %644 = vmatprep.subr.mxu0 0.0
    %645 = vmatpush1.msra.mxu0 0.0
    %646 = vmatprep.subr.mxu0 0.0
    %647 = vmatpush1.msra.mxu0 0.0
    %648 = vmatprep.mubr.f32.mxu0 %v582
    %649 = vmatmul.mubr.f32.gmra.mrb[0].mxu0 %v463
    %v650 = vpop.f32.mrb[0].mxu0
    %v651 = vadd.f32 0.0, %v650
    %v652 = vpop.f32.mrb[0].mxu0
    %v653 = vadd.f32 0.0, %v652
    %654 = vdwg.mxu0
    %655 = vmatprep.subr.mxu0 %v468
    %656 = vmatpush1.msra.mxu0 %v467
    %657 = vmatprep.subr.mxu0 %v472
    %658 = vmatpush1.msra.mxu0 %v471
    %659 = vmatprep.subr.mxu0 %v476
    %660 = vmatpush1.msra.mxu0 %v475
    %661 = vmatprep.subr.mxu0 %v480
    %662 = vmatpush1.msra.mxu0 %v479
    %663 = vmatprep.subr.mxu0 %v484
    %664 = vmatpush1.msra.mxu0 %v483
    %665 = vmatprep.subr.mxu0 %v488
    %666 = vmatpush1.msra.mxu0 %v487
    %667 = vmatprep.subr.mxu0 %v492
    %668 = vmatpush1.msra.mxu0 %v491
    %669 = vmatprep.subr.mxu0 %v496
    %670 = vmatpush1.msra.mxu0 %v495
    %671 = vmatprep.subr.mxu0 %v500
    %672 = vmatpush1.msra.mxu0 %v499
    %673 = vmatprep.subr.mxu0 %v504
    %674 = vmatpush1.msra.mxu0 %v503
    %675 = vmatprep.subr.mxu0 %v508
    %676 = vmatpush1.msra.mxu0 %v507
    %677 = vmatprep.subr.mxu0 %v512
    %678 = vmatpush1.msra.mxu0 %v511
    %679 = vmatprep.subr.mxu0 %v516
    %680 = vmatpush1.msra.mxu0 %v515
    %681 = vmatprep.subr.mxu0 %v520
    %682 = vmatpush1.msra.mxu0 %v519
    %683 = vmatprep.subr.mxu0 %v524
    %684 = vmatpush1.msra.mxu0 %v523
    %685 = vmatprep.subr.mxu0 %v528
    %686 = vmatpush1.msra.mxu0 %v527
    %687 = vmatprep.subr.mxu0 %v532
    %688 = vmatpush1.msra.mxu0 %v531
    %689 = vmatprep.subr.mxu0 %v536
    %690 = vmatpush1.msra.mxu0 %v535
    %691 = vmatprep.subr.mxu0 %v540
    %692 = vmatpush1.msra.mxu0 %v539
    %693 = vmatprep.subr.mxu0 %v544
    %694 = vmatpush1.msra.mxu0 %v543
    %695 = vmatprep.subr.mxu0 %v548
    %696 = vmatpush1.msra.mxu0 %v547
    %697 = vmatprep.subr.mxu0 %v552
    %698 = vmatpush1.msra.mxu0 %v551
    %699 = vmatprep.subr.mxu0 %v556
    %700 = vmatpush1.msra.mxu0 %v555
    %701 = vmatprep.subr.mxu0 %v560
    %702 = vmatpush1.msra.mxu0 %v559
    %703 = vmatprep.subr.mxu0 %v564
    %704 = vmatpush1.msra.mxu0 %v563
    %705 = vmatprep.subr.mxu0 %v568
    %706 = vmatpush1.msra.mxu0 %v567
    %707 = vmatprep.subr.mxu0 %v572
    %708 = vmatpush1.msra.mxu0 %v571
    %709 = vmatprep.subr.mxu0 %v576
    %710 = vmatpush1.msra.mxu0 %v575
    %711 = vmatprep.subr.mxu0 %v580
    %712 = vmatpush1.msra.mxu0 %v579
    %713 = vmatprep.subr.mxu0 0.0
    %714 = vmatpush1.msra.mxu0 0.0
    %715 = vmatprep.subr.mxu0 0.0
    %716 = vmatpush1.msra.mxu0 0.0
    %717 = vmatprep.subr.mxu0 0.0
    %718 = vmatpush1.msra.mxu0 0.0
    %719 = vmatprep.mubr.f32.mxu0 %v582
    %720 = vmatmul.mubr.f32.gmra.mrb[0].mxu0 %v463
    %v721 = vpop.f32.mrb[0].mxu0
    %v722 = vadd.f32 0.0, %v721
    %v723 = vpop.f32.mrb[0].mxu0
    %v724 = vadd.f32 0.0, %v723
    %725 = vdwg.mxu0
    %v726 = vmul.f32 %v722, 1.442695
    %v727 = vpow.pop %v726
    %v728 = vmul.f32 %v724, 1.442695
    %v729 = vpow.pop %v728
    %v730 = vadd.f32 %v727, 1e-08
    %v731 = vadd.f32 %v729, 1e-08
    %v732 = vrcp.pop %v730
    %v733 = vrcp.pop %v731
    %v734 = vmul.f32 %v651, %v461
    %v735 = vmul.f32 %v653, %v462
    %v736 = vmul.f32 %v734, %v732
    %v737 = vmul.f32 %v735, %v733
    %v738 = vld [vmem:[#allocation7] sm:$0xff]
    %v739 = vld [vmem:[#allocation7 + $0x8] sm:$0xff]
    %v740 = vld [vmem:[#allocation7 + $0x10] sm:$0xff]
    %v741 = vld [vmem:[#allocation7 + $0x18] sm:$0xff]
    %v742 = vld [vmem:[#allocation7 + $0x20] sm:$0xff]
    %v743 = vld [vmem:[#allocation7 + $0x28] sm:$0xff]
    %v744 = vld [vmem:[#allocation7 + $0x30] sm:$0xff]
    %v745 = vld [vmem:[#allocation7 + $0x38] sm:$0xff]
    %v746 = vld [vmem:[#allocation7 + $0x40] sm:$0xff]
    %v747 = vld [vmem:[#allocation7 + $0x48] sm:$0xff]
    %v748 = vld [vmem:[#allocation7 + $0x50] sm:$0xff]
    %v749 = vld [vmem:[#allocation7 + $0x58] sm:$0xff]
    %v750 = vld [vmem:[#allocation7 + $0x60] sm:$0xff]
    %v751 = vld [vmem:[#allocation7 + $0x68] sm:$0xff]
    %v752 = vld [vmem:[#allocation7 + $0x70] sm:$0xff]
    %v753 = vld [vmem:[#allocation7 + $0x78] sm:$0xff]
    %v754 = vld [vmem:[#allocation7 + $0x80] sm:$0xff]
    %v755 = vld [vmem:[#allocation7 + $0x88] sm:$0xff]
    %v756 = vld [vmem:[#allocation7 + $0x90] sm:$0xff]
    %v757 = vld [vmem:[#allocation7 + $0x98] sm:$0xff]
    %v758 = vld [vmem:[#allocation7 + $0xa0] sm:$0xff]
    %v759 = vld [vmem:[#allocation7 + $0xa8] sm:$0xff]
    %v760 = vld [vmem:[#allocation7 + $0xb0] sm:$0xff]
    %v761 = vld [vmem:[#allocation7 + $0xb8] sm:$0xff]
    %v762 = vld [vmem:[#allocation7 + $0xc0] sm:$0xff]
    %v763 = vld [vmem:[#allocation7 + $0xc8] sm:$0xff]
    %v764 = vld [vmem:[#allocation7 + $0xd0] sm:$0xff]
    %v765 = vld [vmem:[#allocation7 + $0xd8] sm:$0xff]
    %vm766 = vcmask 785408
    %v768 = vsel %vm766, %v733, 0
    %v771 = vsel %vm766, %v737, 0
    %773 = vmatprep.subr.mxu0 0.0
    %774 = vmatpush1.msra.mxu0 %v738
    %775 = vmatprep.subr.mxu0 0.0
    %776 = vmatpush1.msra.mxu0 %v739
    %777 = vmatprep.subr.mxu0 0.0
    %778 = vmatpush1.msra.mxu0 %v740
    %779 = vmatprep.subr.mxu0 0.0
    %780 = vmatpush1.msra.mxu0 %v741
    %781 = vmatprep.subr.mxu0 0.0
    %782 = vmatpush1.msra.mxu0 %v742
    %783 = vmatprep.subr.mxu0 0.0
    %784 = vmatpush1.msra.mxu0 %v743
    %785 = vmatprep.subr.mxu0 0.0
    %786 = vmatpush1.msra.mxu0 %v744
    %787 = vmatprep.subr.mxu0 0.0
    %788 = vmatpush1.msra.mxu0 %v745
    %789 = vmatprep.subr.mxu0 0.0
    %790 = vmatpush1.msra.mxu0 %v746
    %791 = vmatprep.subr.mxu0 0.0
    %792 = vmatpush1.msra.mxu0 %v747
    %793 = vmatprep.subr.mxu0 0.0
    %794 = vmatpush1.msra.mxu0 %v748
    %795 = vmatprep.subr.mxu0 0.0
    %796 = vmatpush1.msra.mxu0 %v749
    %797 = vmatprep.subr.mxu0 0.0
    %798 = vmatpush1.msra.mxu0 %v750
    %799 = vmatprep.subr.mxu0 0.0
    %800 = vmatpush1.msra.mxu0 %v751
    %801 = vmatprep.subr.mxu0 0.0
    %802 = vmatpush1.msra.mxu0 %v752
    %803 = vmatprep.subr.mxu0 0.0
    %804 = vmatpush1.msra.mxu0 %v753
    %805 = vmatprep.subr.mxu0 0.0
    %806 = vmatpush1.msra.mxu0 %v754
    %807 = vmatprep.subr.mxu0 0.0
    %808 = vmatpush1.msra.mxu0 %v755
    %809 = vmatprep.subr.mxu0 0.0
    %810 = vmatpush1.msra.mxu0 %v756
    %811 = vmatprep.subr.mxu0 0.0
    %812 = vmatpush1.msra.mxu0 %v757
    %813 = vmatprep.subr.mxu0 0.0
    %814 = vmatpush1.msra.mxu0 %v758
    %815 = vmatprep.subr.mxu0 0.0
    %816 = vmatpush1.msra.mxu0 %v759
    %817 = vmatprep.subr.mxu0 0.0
    %818 = vmatpush1.msra.mxu0 %v760
    %819 = vmatprep.subr.mxu0 0.0
    %820 = vmatpush1.msra.mxu0 %v761
    %821 = vmatprep.subr.mxu0 0.0
    %822 = vmatpush1.msra.mxu0 %v762
    %823 = vmatprep.subr.mxu0 0.0
    %824 = vmatpush1.msra.mxu0 %v763
    %825 = vmatprep.subr.mxu0 0.0
    %826 = vmatpush1.msra.mxu0 %v764
    %827 = vmatprep.subr.mxu0 0.0
    %828 = vmatpush1.msra.mxu0 %v765
    %829 = vmatprep.subr.mxu0 0.0
    %830 = vmatpush1.msra.mxu0 0.0
    %831 = vmatprep.subr.mxu0 0.0
    %832 = vmatpush1.msra.mxu0 0.0
    %833 = vmatprep.subr.mxu0 0.0
    %834 = vmatpush1.msra.mxu0 0.0
    %835 = vmatprep.subr.mxu0 0.0
    %836 = vmatpush1.msra.mxu0 0.0
    %837 = vmatprep.mubr.f32.mxu0 %v768
    %838 = vmatmul.mubr.f32.gmra.mrb[0].mxu0 %v732
    %v839 = vpop.f32.mrb[0].mxu0
    %v840 = vadd.f32 0.0, %v839
    %v841 = vpop.f32.mrb[0].mxu0
    %842 = vmatprep.mubr.f32.mxu0 %v771
    %843 = vmatmul.mubr.f32.gmra.mrb[0].mxu0 %v736
    %v844 = vpop.f32.mrb[0].mxu0
    %v845 = vadd.f32 0.0, %v844
    %v846 = vpop.f32.mrb[0].mxu0
    %847 = vdwg.mxu0
    %v848 = vrcp.pop %v840
    %v849 = vmul.f32 1.0, %v848
    %v850 = vmul.f32 %v845, %v849
    %851 = vst [vmem:[%s5] sm:$0xff] %v850
    %v852 = vadd.f32 %v849, 1e-08
    %v853 = vlog2.pop %v852
    %v854 = vmul.f32 %v853, 0.6931472
    %855 = vst [vmem:[%s5 + $0x8] sm:$0xff] %v854
    // Predicated region
    $region38: #{forward.1} parent=1 // pred_check
      _
    $region39: #{forward.1} parent=1 // pred_check_branch
      %857 = sbr.rel (0) target = $region41
    $region40: #{forward.1} parent=1 // pred_region
      _
    $region41: #{forward.1} parent=1 // pred_fallthru
      _
    // Predicated region
    $region42: #{forward.1} parent=1 // pred_check
      _
    $region43: #{forward.1} parent=1 // pred_check_branch
      %859 = sbr.rel (0) target = $region45
    $region44: #{forward.1} parent=1 // pred_region
      _
    $region45: #{forward.1} parent=1 // pred_fallthru
      _
    %860 = vsyncpa [#allocation3], 1
    %861 = vsyncpa [#allocation5], 1
    %862 = vsyncpa [#allocation8], 1

</llo_original>
